<compile_context>
chip_gen: v7x
topology: tpu7x:2x2x1
jax: 0.10.0
libtpu: 0.0.40
codegen_flags: <defaults>
</compile_context>

<pallas_src>
import jax
import jax.numpy as jnp
from jax.experimental import pallas as pl
from jax.experimental.pallas import tpu as pltpu


# ----------------------------------------------------------------------------
# Parameter init (deterministic, mirrors truncated_normal_ from the module)
# ----------------------------------------------------------------------------
def truncated_normal(key, shape, mean=0.0, std=0.1):
    """JAX port of the module's truncated_normal_ initializer."""
    tmp = jax.random.normal(key, shape + (4,), dtype=jnp.float32)
    valid = (tmp < 2.0) & (tmp > -2.0)
    ind = jnp.argmax(valid, axis=-1)                       # index of first valid
    vals = jnp.take_along_axis(tmp, ind[..., None], axis=-1)[..., 0]
    return vals * std + mean


def _round_up(v, m):
    return -(-v // m) * m


# ----------------------------------------------------------------------------
# Fused Pallas kernel: Gaussian-leaf region SPNs + root Sum node
#
#   ll[n, ic] = x[n] @ A[:, ic] + (x[n]*x[n]) @ B[:, ic] + bias[ic]
#   y[n, c]   = logsumexp_ic( ll[n, ic] + log_softmax(W)[ic, c] )
#             = m[n] + log( exp(ll[n] - m[n]) @ softmax(W) )
# ----------------------------------------------------------------------------
def ratspn_fused_kernel(x_ref, a_ref, b_ref, bias_ref, w_ref, o_ref):
    x = x_ref[...]                                          # (tile, F) f32
    a = a_ref[...]                                          # (F, IC)
    b = b_ref[...]                                          # (F, IC)
    bias = bias_ref[...]                                    # (1, IC)
    soft_w = w_ref[...]                                     # (IC, C)

    # Region-SPN Gaussian leaf log-likelihoods via MXU matmuls.
    # TODO(synk): on v6e/v7x a single K=2F contraction ([x | x*x] @ [A; B])
    # would fill the 256-deep MXU and drop one VPU add; kept as two matmuls
    # (v5e 128x128-friendly, and MXU is not the bottleneck here).
    ll = jnp.dot(x, a, preferred_element_type=jnp.float32)
    ll = ll + jnp.dot(x * x, b, preferred_element_type=jnp.float32)
    ll = ll + bias                                          # (tile, IC)

    # Root Sum: numerically-stable logsumexp mixture (softmax(W) precomputed).
    # The max channel contributes exp(0)=1 and softmax columns are strictly
    # positive, so s > 0 always -> no -inf/NaN guard needed.
    m = jnp.max(ll, axis=1, keepdims=True)                  # (tile, 1)
    p = jnp.exp(ll - m)                                     # (tile, IC)
    s = jnp.dot(p, soft_w, preferred_element_type=jnp.float32)   # (tile, C)
    o_ref[...] = m + jnp.log(s)


# ----------------------------------------------------------------------------
# One-time parameter preparation (outside the per-batch hot path)
# ----------------------------------------------------------------------------
def prepare_ratspn_params(region_params, sum_weights):
    """Fold Gaussian-leaf region params + root softmax into kernel operands.

    Returns (A, B, bias, soft_w); call once, these are module parameters."""
    log2pi = jnp.log(2.0 * jnp.pi)
    A_cols, B_cols, bias_cols = [], [], []
    for mu, log_sigma in region_params:
        var = jnp.exp(2.0 * log_sigma)                      # (K, F)
        inv_var = 1.0 / var
        A_cols.append((mu * inv_var).T)                     # (F, K)
        B_cols.append((-0.5 * inv_var).T)                   # (F, K)
        bias_cols.append(
            -0.5 * jnp.sum(mu * mu * inv_var + 2.0 * log_sigma + log2pi, axis=-1))
    A = jnp.concatenate(A_cols, axis=1).astype(jnp.float32)       # (F, IC)
    B = jnp.concatenate(B_cols, axis=1).astype(jnp.float32)       # (F, IC)
    bias = jnp.concatenate(bias_cols)[None, :].astype(jnp.float32)  # (1, IC)
    # Hoisted: softmax of root sum_weights over in_channels (torch dim=1 of
    # the (1, IC, C) parameter).
    soft_w = jax.nn.softmax(sum_weights.astype(jnp.float32), axis=0)  # (IC, C)
    return A, B, bias, soft_w


# ----------------------------------------------------------------------------
# RatSpn.forward hot path: one fused pallas_call, no wrapper HBM passes.
# ----------------------------------------------------------------------------
def rat_spn_forward(x, params, *, tile_n=2048, vmem_budget_bytes=48 * 1024 * 1024):
    A, B, bias, soft_w = params
    N, F = x.shape
    IC, C = soft_w.shape

    # Batch tile: as large as the VMEM budget allows (amortizes grid-step cost).
    tile = max(8, _round_up(min(int(tile_n), _round_up(N, 8)), 8))
    weight_bytes = 4 * (2 * F * IC + IC + IC * C)           # single-buffered weights

    def tile_bytes(t):                                      # double-buffered x + out
        return 4 * 2 * t * (F + C)

    while tile > 8 and tile_bytes(tile) + weight_bytes > vmem_budget_bytes:
        tile = max(8, _round_up(tile // 2, 8))
    # TODO(synk): for very large F on v7x, add an F-contraction grid axis
    # ("arbitrary") with a VMEM accumulator instead of keeping all of A/B resident.
    vmem_limit = int(min(64 << 20,
                         max(16 << 20,
                             tile_bytes(tile) + 2 * weight_bytes + (2 << 20))))

    const_map = lambda i: (0, 0)
    cost = pl.CostEstimate(
        flops=int(N * (4 * F * IC + 2 * IC * C + 3 * IC + F + 2 * C)),
        transcendentals=int(N * (IC + C)),
        bytes_accessed=int(4 * (N * F + N * C + 2 * F * IC + IC + IC * C)))

    out = pl.pallas_call(
        ratspn_fused_kernel,
        out_shape=jax.ShapeDtypeStruct((N, C), jnp.float32),
        grid=(pl.cdiv(N, tile),),
        in_specs=[
            # x tile: pipelined / double-buffered, last dim = full extent (no pad).
            pl.BlockSpec((tile, F), lambda i: (i, 0)),
            # Constant weights: VMEM-resident, single-buffered (v7x VMEM budget).
            pl.BlockSpec((F, IC), const_map, pipeline_mode=pl.Buffered(1)),
            pl.BlockSpec((F, IC), const_map, pipeline_mode=pl.Buffered(1)),
            pl.BlockSpec((1, IC), const_map, pipeline_mode=pl.Buffered(1)),
            pl.BlockSpec((IC, C), const_map, pipeline_mode=pl.Buffered(1)),
        ],
        # Output unpadded: (tile, C) with C = full extent -> 32x less writeback
        # than padding C to 128, and no trailing slice op.
        out_specs=pl.BlockSpec((tile, C), lambda i: (i, 0)),
        compiler_params=pltpu.CompilerParams(
            dimension_semantics=("parallel",),
            vmem_limit_bytes=vmem_limit),
        cost_estimate=cost,
    )(x.astype(jnp.float32), A, B, bias, soft_w)
    return out


# ----------------------------------------------------------------------------
# Region SPN stand-ins (constructor-provided black boxes in the PyTorch module)
# ----------------------------------------------------------------------------
def region_spn_forward(x, mu, log_sigma):
    # TODO(synk): the internal structure of `region_spns` (leaf/product/sum
    # recursions) is not defined in the provided module; use a synthetic
    # Gaussian-leaf product stand-in that emits (N, 1, K) log-likelihoods.
    var = jnp.exp(2.0 * log_sigma)                         # (K, F)
    ll = -0.5 * ((x[:, None, :] - mu[None]) ** 2 / var[None]
                 + 2.0 * log_sigma[None]
                 + jnp.log(2.0 * jnp.pi))                  # (N, K, F)
    out = jnp.sum(ll, axis=-1)                             # product over features
    return out[:, None, :]                                 # (N, 1, K)


if __name__ == "__main__":
    # Small config: 2 region SPNs (num_recursions > 1), C=4 classes, S=I=4
    N, F = 8, 16
    C, S, I = 4, 4, 4
    NUM_REGION_SPNS = 2
    K = S * S                      # channels contributed per region SPN
    IC = NUM_REGION_SPNS * K       # root in_channels

    key = jax.random.PRNGKey(0)
    kx, kw, *kr = jax.random.split(key, 2 + 2 * NUM_REGION_SPNS)

    x = jax.random.normal(kx, (N, F), dtype=jnp.float32)

    # region SPN stand-in parameters (deterministic)
    region_params = []
    for r in range(NUM_REGION_SPNS):
        mu = jax.random.normal(kr[2 * r], (K, F), dtype=jnp.float32)
        log_sigma = 0.1 * jax.random.normal(kr[2 * r + 1], (K, F), dtype=jnp.float32)
        region_params.append((mu, log_sigma))

    # root Sum weights, truncated-normal std=0.5 (as in RatSpn.init_weights)
    sum_weights = truncated_normal(kw, (1, IC, C), std=0.5)[0]   # (IC, C)
    _priors = jnp.log(jnp.asarray(1.0 / C, dtype=jnp.float32))   # unused in forward

    # Parameters are prepared ONCE (not in the per-batch hot path).
    params = jax.tree.map(jax.block_until_ready,
                          prepare_ratspn_params(region_params, sum_weights))

    out = jax.block_until_ready(rat_spn_forward(x, params))

    # pure-JAX reference of the full forward (correctness check)
    splits = [region_spn_forward(x, mu, ls)[:, 0, :] for (mu, ls) in region_params]
    xc = jnp.stack(splits, axis=1).reshape(N, -1)                 # (N, IC)
    logw = jax.nn.log_softmax(sum_weights, axis=0)
    ref = jax.nn.logsumexp(xc[:, :, None] + logw[None], axis=1)   # (N, C)

    assert out.shape == (N, C), out.shape
    assert bool(jnp.all(jnp.isfinite(out))), out
    assert jnp.allclose(out, ref, atol=5e-2, rtol=5e-2), (out, ref)
    print("KERNEL_OK")
</pallas_src>

<mosaic_0001>
module attributes {stable_mosaic.version = 11 : i64} {
  func.func @ratspn_fused_kernel(%arg0: i32, %arg1: memref<8x16xf32, #tpu.memory_space<vmem>>, %arg2: memref<16x32xf32, #tpu.memory_space<vmem>>, %arg3: memref<16x32xf32, #tpu.memory_space<vmem>>, %arg4: memref<1x32xf32, #tpu.memory_space<vmem>>, %arg5: memref<32x4xf32, #tpu.memory_space<vmem>>, %arg6: memref<8x4xf32, #tpu.memory_space<vmem>>) attributes {dimension_semantics = [#tpu.dimension_semantics<parallel>], iteration_bounds = array<i64: 1>, scalar_prefetch = 0 : i64, scratch_operands = 0 : i64, tpu.core_type = #tpu.core_type<tc>, window_params = [{transform_indices = @transform_0, window_bounds = array<i64: 8, 16>}, {pipeline_mode = #tpu.pipeline_mode<synchronous>, transform_indices = @transform_1, window_bounds = array<i64: 16, 32>}, {pipeline_mode = #tpu.pipeline_mode<synchronous>, transform_indices = @transform_2, window_bounds = array<i64: 16, 32>}, {pipeline_mode = #tpu.pipeline_mode<synchronous>, transform_indices = @transform_3, window_bounds = array<i64: 1, 32>}, {pipeline_mode = #tpu.pipeline_mode<synchronous>, transform_indices = @transform_4, window_bounds = array<i64: 32, 4>}, {transform_indices = @transform_5, window_bounds = array<i64: 8, 4>}]} {
    %c0 = arith.constant 0 : index
    %c0_0 = arith.constant 0 : index
    %0 = vector.load %arg1[%c0, %c0_0] : memref<8x16xf32, #tpu.memory_space<vmem>>, vector<8x16xf32>
    %c0_1 = arith.constant 0 : index
    %c0_2 = arith.constant 0 : index
    %1 = vector.load %arg2[%c0_1, %c0_2] : memref<16x32xf32, #tpu.memory_space<vmem>>, vector<16x32xf32>
    %c0_3 = arith.constant 0 : index
    %c0_4 = arith.constant 0 : index
    %2 = vector.load %arg3[%c0_3, %c0_4] : memref<16x32xf32, #tpu.memory_space<vmem>>, vector<16x32xf32>
    %c0_5 = arith.constant 0 : index
    %c0_6 = arith.constant 0 : index
    %3 = vector.load %arg4[%c0_5, %c0_6] : memref<1x32xf32, #tpu.memory_space<vmem>>, vector<1x32xf32>
    %c0_7 = arith.constant 0 : index
    %c0_8 = arith.constant 0 : index
    %4 = vector.load %arg5[%c0_7, %c0_8] : memref<32x4xf32, #tpu.memory_space<vmem>>, vector<32x4xf32>
    %cst = arith.constant dense<0.000000e+00> : vector<8x32xf32>
    %5 = tpu.matmul %0, %1, %cst {dimension_numbers = #tpu.dot_dimension_numbers<[1], [0], [0], [1], [0, 0, 1, 1], [], []>} : vector<8x16xf32>, vector<16x32xf32>, vector<8x32xf32> -> vector<8x32xf32>
    %6 = arith.mulf %0, %0 : vector<8x16xf32>
    %cst_9 = arith.constant dense<0.000000e+00> : vector<8x32xf32>
    %7 = tpu.matmul %6, %2, %cst_9 {dimension_numbers = #tpu.dot_dimension_numbers<[1], [0], [0], [1], [0, 0, 1, 1], [], []>} : vector<8x16xf32>, vector<16x32xf32>, vector<8x32xf32> -> vector<8x32xf32>
    %8 = arith.addf %5, %7 : vector<8x32xf32>
    %9 = vector.broadcast %3 : vector<1x32xf32> to vector<8x32xf32>
    %10 = arith.addf %8, %9 : vector<8x32xf32>
    %cst_10 = arith.constant dense<0xFF800000> : vector<8xf32>
    %11 = vector.multi_reduction <maximumf>, %10, %cst_10 [1] : vector<8x32xf32> to vector<8xf32>
    %12 = vector.shape_cast %11 : vector<8xf32> to vector<8x1xf32>
    %13 = vector.broadcast %12 : vector<8x1xf32> to vector<8x32xf32>
    %14 = arith.subf %10, %13 : vector<8x32xf32>
    %15 = math.exp %14 : vector<8x32xf32>
    %cst_11 = arith.constant dense<0.000000e+00> : vector<8x4xf32>
    %16 = tpu.matmul %15, %4, %cst_11 {dimension_numbers = #tpu.dot_dimension_numbers<[1], [0], [0], [1], [0, 0, 1, 1], [], []>} : vector<8x32xf32>, vector<32x4xf32>, vector<8x4xf32> -> vector<8x4xf32>
    %17 = math.log %16 : vector<8x4xf32>
    %18 = vector.broadcast %12 : vector<8x1xf32> to vector<8x4xf32>
    %19 = arith.addf %18, %17 : vector<8x4xf32>
    %c0_12 = arith.constant 0 : index
    %c0_13 = arith.constant 0 : index
    %20 = vector.load %arg6[%c0_12, %c0_13] : memref<8x4xf32, #tpu.memory_space<vmem>>, vector<8x4xf32>
    tpu.vector_store %arg6[%c0_12, %c0_13], %19 {strides = array<i32>} : memref<8x4xf32, #tpu.memory_space<vmem>>, vector<8x4xf32>,
    return
  }
  func.func @transform_0(%arg0: i32) -> (i32, i32) {
    %c0_i32 = arith.constant 0 : i32
    %c0_i32_0 = arith.constant 0 : i32
    return %arg0, %c0_i32 : i32, i32
  }
  func.func @transform_1(%arg0: i32) -> (i32, i32) {
    %c0_i32 = arith.constant 0 : i32
    %c0_i32_0 = arith.constant 0 : i32
    %c0_i32_1 = arith.constant 0 : i32
    return %c0_i32, %c0_i32_0 : i32, i32
  }
  func.func @transform_2(%arg0: i32) -> (i32, i32) {
    %c0_i32 = arith.constant 0 : i32
    %c0_i32_0 = arith.constant 0 : i32
    %c0_i32_1 = arith.constant 0 : i32
    return %c0_i32, %c0_i32_0 : i32, i32
  }
  func.func @transform_3(%arg0: i32) -> (i32, i32) {
    %c0_i32 = arith.constant 0 : i32
    %c0_i32_0 = arith.constant 0 : i32
    %c0_i32_1 = arith.constant 0 : i32
    return %c0_i32, %c0_i32_0 : i32, i32
  }
  func.func @transform_4(%arg0: i32) -> (i32, i32) {
    %c0_i32 = arith.constant 0 : i32
    %c0_i32_0 = arith.constant 0 : i32
    %c0_i32_1 = arith.constant 0 : i32
    return %c0_i32, %c0_i32_0 : i32, i32
  }
  func.func @transform_5(%arg0: i32) -> (i32, i32) {
    %c0_i32 = arith.constant 0 : i32
    %c0_i32_0 = arith.constant 0 : i32
    return %arg0, %c0_i32 : i32, i32
  }
}

</mosaic_0001>

<llo_original>
// kernel: tpu_custom_call.1
$region0: #{tpu_custom_call.1}
  #allocation0 [shape = 'u32[]', space=smem, size = 0x4, offset = 0x4, fixed_abs, tag = 'smem constant byte address 0x4 - core index']
  #allocation1 [shape = 'u32[144,128]{1,0:T(1,128)}', space=vmem, size = 0x12000, scoped, tag = 'internal scratch']
  %s0 = inlined_call_operand.hbm [shape: f32[8,16], index: 0, kind: input, shape index: {}]
  %s1 = inlined_call_operand.vmem [shape: f32[16,32], index: 1, kind: input, shape index: {}]
  %s2 = inlined_call_operand.vmem [shape: f32[16,32], index: 2, kind: input, shape index: {}]
  %s3 = inlined_call_operand.vmem [shape: f32[1,32], index: 3, kind: input, shape index: {}]
  %s4 = inlined_call_operand.vmem [shape: f32[32,4], index: 4, kind: input, shape index: {}]
  %s5 = inlined_call_operand.vmem [shape: f32[8,4], index: 5, kind: output, shape index: {}]
  %s6 = sld [smem:[#allocation0]]
  $region34: #{tpu_custom_call.1} parent=0
    _
  %s8 = ssub.s32 1, %s6
  %s9 = scalar_select 0, %s8, %s6
  $region1: #{tpu_custom_call.1} parent=0
    #allocation2 [shape = 'u8[4096]{0}', space=vmem, size = 0x1000, scoped, tag = 'input window, operand 0, single buffered']
    #allocation3 [shape = 's32[1]{0}', space=sflag, size = 0x4, scoped, tag = 'scoped memory for tpu_custom_call.1']
    %10 = vsyncpa [#allocation3], 0
    // Predicated region
    $region2: #{tpu_custom_call.1} parent=1 // pred_check
      _
    $region3: #{tpu_custom_call.1} parent=1 // pred_check_branch
      %12 = sbr.rel (0) target = $region5
    $region4: #{tpu_custom_call.1} parent=1 // pred_region
      %s14 = ssub.s32 128, 128
      %15 = vsyncadd [#allocation3], %s14
      %s17 = sshll.u32 [#allocation2], 4
      %s18 = int_to_ptr.vmem [resolvable:$true] %s17
      %20 = dma.hbm_to_vmem [thread:$0]  %s0, 128, %s18, [#allocation3]
    $region5: #{tpu_custom_call.1} parent=1 // pred_fallthru
      _
    // Predicated region
    $region6: #{tpu_custom_call.1} parent=1 // pred_check
      _
    $region7: #{tpu_custom_call.1} parent=1 // pred_check_branch
      %22 = sbr.rel (0) target = $region9
    $region8: #{tpu_custom_call.1} parent=1 // pred_region
      _
    $region9: #{tpu_custom_call.1} parent=1 // pred_fallthru
      _
    // Predicated region
    $region10: #{tpu_custom_call.1} parent=1 // pred_check
      _
    $region11: #{tpu_custom_call.1} parent=1 // pred_check_branch
      %24 = sbr.rel (0) target = $region13
    $region12: #{tpu_custom_call.1} parent=1 // pred_region
      _
    $region13: #{tpu_custom_call.1} parent=1 // pred_fallthru
      _
    // Predicated region
    $region14: #{tpu_custom_call.1} parent=1 // pred_check
      _
    $region15: #{tpu_custom_call.1} parent=1 // pred_check_branch
      %26 = sbr.rel (0) target = $region17
    $region16: #{tpu_custom_call.1} parent=1 // pred_region
      _
    $region17: #{tpu_custom_call.1} parent=1 // pred_fallthru
      _
    // Predicated region
    $region18: #{tpu_custom_call.1} parent=1 // pred_check
      _
    $region19: #{tpu_custom_call.1} parent=1 // pred_check_branch
      %28 = sbr.rel (0) target = $region21
    $region20: #{tpu_custom_call.1} parent=1 // pred_region
      _
    $region21: #{tpu_custom_call.1} parent=1 // pred_fallthru
      _
    // Predicated region
    $region22: #{tpu_custom_call.1} parent=1 // pred_check
      _
    $region23: #{tpu_custom_call.1} parent=1 // pred_check_branch
      %30 = sbr.rel (0) target = $region25
    $region24: #{tpu_custom_call.1} parent=1 // pred_region
      %31 = dma.done [#allocation3], 128
    $region25: #{tpu_custom_call.1} parent=1 // pred_fallthru
      _
    %v32 = vld [vmem:[#allocation2] sm:$0xff]
    %v33 = vld [vmem:[%s1] sm:$0xff]
    %v34 = vld [vmem:[%s1 + $0x8] sm:$0xff]
    %v35 = vld [vmem:[%s2] sm:$0xff]
    %v36 = vld [vmem:[%s2 + $0x8] sm:$0xff]
    %v37 = vld [vmem:[%s3] sm:$0x1]
    %v38 = vld [vmem:[%s4] sm:$0xff]
    %v39 = vld [vmem:[%s4 + $0x8] sm:$0xff]
    %v40 = vld [vmem:[%s4 + $0x10] sm:$0xff]
    %v41 = vld [vmem:[%s4 + $0x18] sm:$0xff]
    %v42 = vmul.f32 %v32, %v32
    %vm43 = vcmask 130048
    %v45 = vsel %vm43, %v42, 0
    %47 = vmatprep.subr.mxu0 0.0
    %48 = vmatpush1.msra.mxu0 %v35
    %49 = vmatprep.subr.mxu0 0.0
    %50 = vmatpush1.msra.mxu0 %v36
    %51 = vmatprep.subr.mxu0 0.0
    %52 = vmatpush1.msra.mxu0 0.0
    %53 = vmatprep.subr.mxu0 0.0
    %54 = vmatpush1.msra.mxu0 0.0
    %55 = vmatprep.subr.mxu0 0.0
    %56 = vmatpush1.msra.mxu0 0.0
    %57 = vmatprep.subr.mxu0 0.0
    %58 = vmatpush1.msra.mxu0 0.0
    %59 = vmatprep.subr.mxu0 0.0
    %60 = vmatpush1.msra.mxu0 0.0
    %61 = vmatprep.subr.mxu0 0.0
    %62 = vmatpush1.msra.mxu0 0.0
    %63 = vmatprep.subr.mxu0 0.0
    %64 = vmatpush1.msra.mxu0 0.0
    %65 = vmatprep.subr.mxu0 0.0
    %66 = vmatpush1.msra.mxu0 0.0
    %67 = vmatprep.subr.mxu0 0.0
    %68 = vmatpush1.msra.mxu0 0.0
    %69 = vmatprep.subr.mxu0 0.0
    %70 = vmatpush1.msra.mxu0 0.0
    %71 = vmatprep.subr.mxu0 0.0
    %72 = vmatpush1.msra.mxu0 0.0
    %73 = vmatprep.subr.mxu0 0.0
    %74 = vmatpush1.msra.mxu0 0.0
    %75 = vmatprep.subr.mxu0 0.0
    %76 = vmatpush1.msra.mxu0 0.0
    %77 = vmatprep.subr.mxu0 0.0
    %78 = vmatpush1.msra.mxu0 0.0
    %79 = vmatprep.subr.mxu0 0.0
    %80 = vmatpush1.msra.mxu0 0.0
    %81 = vmatprep.subr.mxu0 0.0
    %82 = vmatpush1.msra.mxu0 0.0
    %83 = vmatprep.subr.mxu0 0.0
    %84 = vmatpush1.msra.mxu0 0.0
    %85 = vmatprep.subr.mxu0 0.0
    %86 = vmatpush1.msra.mxu0 0.0
    %87 = vmatprep.subr.mxu0 0.0
    %88 = vmatpush1.msra.mxu0 0.0
    %89 = vmatprep.subr.mxu0 0.0
    %90 = vmatpush1.msra.mxu0 0.0
    %91 = vmatprep.subr.mxu0 0.0
    %92 = vmatpush1.msra.mxu0 0.0
    %93 = vmatprep.subr.mxu0 0.0
    %94 = vmatpush1.msra.mxu0 0.0
    %95 = vmatprep.subr.mxu0 0.0
    %96 = vmatpush1.msra.mxu0 0.0
    %97 = vmatprep.subr.mxu0 0.0
    %98 = vmatpush1.msra.mxu0 0.0
    %99 = vmatprep.subr.mxu0 0.0
    %100 = vmatpush1.msra.mxu0 0.0
    %101 = vmatprep.subr.mxu0 0.0
    %102 = vmatpush1.msra.mxu0 0.0
    %103 = vmatprep.subr.mxu0 0.0
    %104 = vmatpush1.msra.mxu0 0.0
    %105 = vmatprep.subr.mxu0 0.0
    %106 = vmatpush1.msra.mxu0 0.0
    %107 = vmatprep.subr.mxu0 0.0
    %108 = vmatpush1.msra.mxu0 0.0
    %109 = vmatprep.subr.mxu0 0.0
    %110 = vmatpush1.msra.mxu0 0.0
    %111 = vmatprep.mubr.f32.mxu0 0.0
    %112 = vmatmul.mubr.f32.gmra.mrb[0].mxu0 %v45
    %v113 = vpop.f32.mrb[0].mxu0
    %v114 = vadd.f32 0.0, %v113
    %v115 = vpop.f32.mrb[0].mxu0
    %116 = vdwg.mxu0
    %v118 = vsel %vm43, %v32, 0
    %120 = vmatprep.subr.mxu0 0.0
    %121 = vmatpush1.msra.mxu0 %v33
    %122 = vmatprep.subr.mxu0 0.0
    %123 = vmatpush1.msra.mxu0 %v34
    %124 = vmatprep.subr.mxu0 0.0
    %125 = vmatpush1.msra.mxu0 0.0
    %126 = vmatprep.subr.mxu0 0.0
    %127 = vmatpush1.msra.mxu0 0.0
    %128 = vmatprep.subr.mxu0 0.0
    %129 = vmatpush1.msra.mxu0 0.0
    %130 = vmatprep.subr.mxu0 0.0
    %131 = vmatpush1.msra.mxu0 0.0
    %132 = vmatprep.subr.mxu0 0.0
    %133 = vmatpush1.msra.mxu0 0.0
    %134 = vmatprep.subr.mxu0 0.0
    %135 = vmatpush1.msra.mxu0 0.0
    %136 = vmatprep.subr.mxu0 0.0
    %137 = vmatpush1.msra.mxu0 0.0
    %138 = vmatprep.subr.mxu0 0.0
    %139 = vmatpush1.msra.mxu0 0.0
    %140 = vmatprep.subr.mxu0 0.0
    %141 = vmatpush1.msra.mxu0 0.0
    %142 = vmatprep.subr.mxu0 0.0
    %143 = vmatpush1.msra.mxu0 0.0
    %144 = vmatprep.subr.mxu0 0.0
    %145 = vmatpush1.msra.mxu0 0.0
    %146 = vmatprep.subr.mxu0 0.0
    %147 = vmatpush1.msra.mxu0 0.0
    %148 = vmatprep.subr.mxu0 0.0
    %149 = vmatpush1.msra.mxu0 0.0
    %150 = vmatprep.subr.mxu0 0.0
    %151 = vmatpush1.msra.mxu0 0.0
    %152 = vmatprep.subr.mxu0 0.0
    %153 = vmatpush1.msra.mxu0 0.0
    %154 = vmatprep.subr.mxu0 0.0
    %155 = vmatpush1.msra.mxu0 0.0
    %156 = vmatprep.subr.mxu0 0.0
    %157 = vmatpush1.msra.mxu0 0.0
    %158 = vmatprep.subr.mxu0 0.0
    %159 = vmatpush1.msra.mxu0 0.0
    %160 = vmatprep.subr.mxu0 0.0
    %161 = vmatpush1.msra.mxu0 0.0
    %162 = vmatprep.subr.mxu0 0.0
    %163 = vmatpush1.msra.mxu0 0.0
    %164 = vmatprep.subr.mxu0 0.0
    %165 = vmatpush1.msra.mxu0 0.0
    %166 = vmatprep.subr.mxu0 0.0
    %167 = vmatpush1.msra.mxu0 0.0
    %168 = vmatprep.subr.mxu0 0.0
    %169 = vmatpush1.msra.mxu0 0.0
    %170 = vmatprep.subr.mxu0 0.0
    %171 = vmatpush1.msra.mxu0 0.0
    %172 = vmatprep.subr.mxu0 0.0
    %173 = vmatpush1.msra.mxu0 0.0
    %174 = vmatprep.subr.mxu0 0.0
    %175 = vmatpush1.msra.mxu0 0.0
    %176 = vmatprep.subr.mxu0 0.0
    %177 = vmatpush1.msra.mxu0 0.0
    %178 = vmatprep.subr.mxu0 0.0
    %179 = vmatpush1.msra.mxu0 0.0
    %180 = vmatprep.subr.mxu0 0.0
    %181 = vmatpush1.msra.mxu0 0.0
    %182 = vmatprep.subr.mxu0 0.0
    %183 = vmatpush1.msra.mxu0 0.0
    %184 = vmatprep.mubr.f32.mxu0 0.0
    %185 = vmatmul.mubr.f32.gmra.mrb[0].mxu0 %v118
    %v186 = vpop.f32.mrb[0].mxu0
    %v187 = vadd.f32 %v114, %v186
    %v188 = vpop.f32.mrb[0].mxu0
    %189 = vdwg.mxu0
    %v191 = vlaneseq
    %v192 = vshrl.u32 %v191, 7
    %v193 = vsub.s32 0, %v192
    %v194 = vrot.slane %v37, %v193
    %v196 = vadd.f32 %v187, %v194
    %vm197 = vcmask 261120
    %v198 = vsel %vm197, %v196, -inf
    %199 = vmax.xlane.f32.xlu0 %v198
    %v200 = vpop.xlane.xlu0 %199
    %v201 = vsub.f32 %v196, %v200
    %v202 = vmul.f32 %v201, 1.442695
    %v203 = vpow.pop %v202
    %v205 = vsel %vm197, %v203, 0
    %207 = vmatprep.subr.mxu0 0.0
    %208 = vmatpush1.msra.mxu0 %v38
    %209 = vmatprep.subr.mxu0 0.0
    %210 = vmatpush1.msra.mxu0 %v39
    %211 = vmatprep.subr.mxu0 0.0
    %212 = vmatpush1.msra.mxu0 %v40
    %213 = vmatprep.subr.mxu0 0.0
    %214 = vmatpush1.msra.mxu0 %v41
    %215 = vmatprep.subr.mxu0 0.0
    %216 = vmatpush1.msra.mxu0 0.0
    %217 = vmatprep.subr.mxu0 0.0
    %218 = vmatpush1.msra.mxu0 0.0
    %219 = vmatprep.subr.mxu0 0.0
    %220 = vmatpush1.msra.mxu0 0.0
    %221 = vmatprep.subr.mxu0 0.0
    %222 = vmatpush1.msra.mxu0 0.0
    %223 = vmatprep.subr.mxu0 0.0
    %224 = vmatpush1.msra.mxu0 0.0
    %225 = vmatprep.subr.mxu0 0.0
    %226 = vmatpush1.msra.mxu0 0.0
    %227 = vmatprep.subr.mxu0 0.0
    %228 = vmatpush1.msra.mxu0 0.0
    %229 = vmatprep.subr.mxu0 0.0
    %230 = vmatpush1.msra.mxu0 0.0
    %231 = vmatprep.subr.mxu0 0.0
    %232 = vmatpush1.msra.mxu0 0.0
    %233 = vmatprep.subr.mxu0 0.0
    %234 = vmatpush1.msra.mxu0 0.0
    %235 = vmatprep.subr.mxu0 0.0
    %236 = vmatpush1.msra.mxu0 0.0
    %237 = vmatprep.subr.mxu0 0.0
    %238 = vmatpush1.msra.mxu0 0.0
    %239 = vmatprep.subr.mxu0 0.0
    %240 = vmatpush1.msra.mxu0 0.0
    %241 = vmatprep.subr.mxu0 0.0
    %242 = vmatpush1.msra.mxu0 0.0
    %243 = vmatprep.subr.mxu0 0.0
    %244 = vmatpush1.msra.mxu0 0.0
    %245 = vmatprep.subr.mxu0 0.0
    %246 = vmatpush1.msra.mxu0 0.0
    %247 = vmatprep.subr.mxu0 0.0
    %248 = vmatpush1.msra.mxu0 0.0
    %249 = vmatprep.subr.mxu0 0.0
    %250 = vmatpush1.msra.mxu0 0.0
    %251 = vmatprep.subr.mxu0 0.0
    %252 = vmatpush1.msra.mxu0 0.0
    %253 = vmatprep.subr.mxu0 0.0
    %254 = vmatpush1.msra.mxu0 0.0
    %255 = vmatprep.subr.mxu0 0.0
    %256 = vmatpush1.msra.mxu0 0.0
    %257 = vmatprep.subr.mxu0 0.0
    %258 = vmatpush1.msra.mxu0 0.0
    %259 = vmatprep.subr.mxu0 0.0
    %260 = vmatpush1.msra.mxu0 0.0
    %261 = vmatprep.subr.mxu0 0.0
    %262 = vmatpush1.msra.mxu0 0.0
    %263 = vmatprep.subr.mxu0 0.0
    %264 = vmatpush1.msra.mxu0 0.0
    %265 = vmatprep.subr.mxu0 0.0
    %266 = vmatpush1.msra.mxu0 0.0
    %267 = vmatprep.subr.mxu0 0.0
    %268 = vmatpush1.msra.mxu0 0.0
    %269 = vmatprep.subr.mxu0 0.0
    %270 = vmatpush1.msra.mxu0 0.0
    %271 = vmatprep.mubr.f32.mxu0 0.0
    %272 = vmatmul.mubr.f32.gmra.mrb[0].mxu0 %v205
    %v273 = vpop.f32.mrb[0].mxu0
    %v274 = vadd.f32 0.0, %v273
    %v275 = vpop.f32.mrb[0].mxu0
    %276 = vdwg.mxu0
    %v277 = vlog2.pop %v274
    %v278 = vmul.f32 %v277, 0.6931472
    %v279 = vadd.f32 %v200, %v278
    %vm280 = vcmask 31744
    %281 = vst.msk [vmem:[%s5] sm:$0xff] %vm280, %v279
    // Predicated region
    $region26: #{tpu_custom_call.1} parent=1 // pred_check
      _
    $region27: #{tpu_custom_call.1} parent=1 // pred_check_branch
      %283 = sbr.rel (0) target = $region29
    $region28: #{tpu_custom_call.1} parent=1 // pred_region
      _
    $region29: #{tpu_custom_call.1} parent=1 // pred_fallthru
      _
    // Predicated region
    $region30: #{tpu_custom_call.1} parent=1 // pred_check
      _
    $region31: #{tpu_custom_call.1} parent=1 // pred_check_branch
      %285 = sbr.rel (0) target = $region33
    $region32: #{tpu_custom_call.1} parent=1 // pred_region
      _
    $region33: #{tpu_custom_call.1} parent=1 // pred_fallthru
      _
    %286 = vsyncpa [#allocation3], 1

</llo_original>
